<compile_context>
chip_gen: v7x
topology: tpu7x:2x2x1
jax: 0.10.0
libtpu: 0.0.40
codegen_flags: <defaults>
</compile_context>

<pallas_src>
import functools

import jax
import jax.numpy as jnp
from jax.experimental import pallas as pl
from jax.experimental.pallas import tpu as pltpu

BN_EPS = 1e-5


def _round_up(a, b):
    return (a + b - 1) // b * b


def _pick_tiles(m_needed, npad):
    """Register-friendly (tm, tn): keep the f32 accumulator <= ~96 KiB of vregs."""
    tm = min(128, _round_up(max(m_needed, 1), 8))
    tn = 256 if (npad % 256 == 0 and tm * 256 * 4 <= 96 * 1024) else 128
    return tm, tn


# ----------------------------------------------------------------------------
# Kernel 1: fused bf16 matmul + BatchNorm affine + ReLU  (conv / 1x1 / FC)
# ----------------------------------------------------------------------------

def _matmul_bn_relu_kernel(x_ref, w_ref, s_ref, b_ref, o_ref, *, relu):
    acc = jnp.dot(x_ref[...], w_ref[...], preferred_element_type=jnp.float32)
    out = acc * s_ref[...] + b_ref[...]
    if relu:
        out = jnp.maximum(out, 0.0)
    o_ref[...] = out.astype(o_ref.dtype)


@functools.lru_cache(maxsize=None)
def _build_matmul(m_pad, kp, npad, tm, tn, relu, out_dtype_name):
    out_dtype = jnp.dtype(out_dtype_name)
    kernel = functools.partial(_matmul_bn_relu_kernel, relu=relu)
    call = pl.pallas_call(
        kernel,
        out_shape=jax.ShapeDtypeStruct((m_pad, npad), out_dtype),
        grid_spec=pltpu.PrefetchScalarGridSpec(
            num_scalar_prefetch=0,
            # N outer so each weight slab is fetched exactly once and stays
            # VMEM-resident across the inner M tiles; both axes parallel so a
            # v7x megacore can split the work.
            grid=(npad // tn, m_pad // tm),
            in_specs=[
                pl.BlockSpec((tm, kp), lambda j, i: (i, 0)),    # activation M tile
                pl.BlockSpec((kp, tn), lambda j, i: (0, j)),    # weight slab (N tile)
                pl.BlockSpec((1, tn), lambda j, i: (0, j)),     # BN scale
                pl.BlockSpec((1, tn), lambda j, i: (0, j)),     # BN bias
            ],
            out_specs=pl.BlockSpec((tm, tn), lambda j, i: (i, j)),
        ),
        compiler_params=pltpu.CompilerParams(
            dimension_semantics=("parallel", "parallel")),
    )
    return jax.jit(call)


def matmul_fused(x_rows, w, scale, bias, *, m_needed, relu, out_dtype):
    """x_rows: (R, K) bf16 with R >= m_needed valid rows.  w: (K, Npad) bf16."""
    kp, npad = w.shape
    tm, tn = _pick_tiles(m_needed, npad)
    grid_m = -(-m_needed // tm)
    m_pad = grid_m * tm
    x_rows = x_rows.astype(jnp.bfloat16)
    r = x_rows.shape[0]
    if r < m_pad:
        x_rows = jnp.pad(x_rows, ((0, m_pad - r), (0, 0)))
    elif r > m_pad:
        x_rows = x_rows[:m_pad]
    fn = _build_matmul(m_pad, kp, npad, tm, tn, bool(relu),
                       jnp.dtype(out_dtype).name)
    return fn(x_rows, w, scale, bias)


# ----------------------------------------------------------------------------
# Kernel 2: pooling (reduce a (kh*kw, M, C) window stack), tiled over (C, M)
# ----------------------------------------------------------------------------

def _pool_kernel(x_ref, o_ref, *, taps, op, inv_count):
    if op == "max":
        acc = jnp.full(o_ref.shape, -jnp.inf, jnp.float32)
        for t in range(taps):
            acc = jnp.maximum(acc, x_ref[t].astype(jnp.float32))
    else:
        acc = jnp.zeros(o_ref.shape, jnp.float32)
        for t in range(taps):
            acc = acc + x_ref[t].astype(jnp.float32)
        acc = acc * inv_count
    o_ref[...] = acc.astype(o_ref.dtype)


@functools.lru_cache(maxsize=None)
def _build_pool(taps, m_pad, cpad, tm, tc, op, inv_count):
    kernel = functools.partial(_pool_kernel, taps=taps, op=op,
                               inv_count=inv_count)
    call = pl.pallas_call(
        kernel,
        out_shape=jax.ShapeDtypeStruct((m_pad, cpad), jnp.bfloat16),
        grid_spec=pltpu.PrefetchScalarGridSpec(
            num_scalar_prefetch=0,
            grid=(cpad // tc, m_pad // tm),
            in_specs=[pl.BlockSpec((taps, tm, tc), lambda j, i: (0, i, j))],
            out_specs=pl.BlockSpec((tm, tc), lambda j, i: (i, j)),
        ),
        compiler_params=pltpu.CompilerParams(
            dimension_semantics=("parallel", "parallel")),
    )
    return jax.jit(call)


def pool2d(x, ksize, stride, padding, op):
    """x: (B, H, W, C) bf16 NHWC.  op in {'max','avg'}.
    avg matches nn.AvgPool2d default (count_include_pad=True)."""
    B, H, W, C = x.shape
    kh, kw = ksize
    sh, sw = stride
    ph, pw = padding
    pad_val = float("-inf") if op == "max" else 0.0
    Hp, Wp = H + 2 * ph, W + 2 * pw
    oh = (Hp - kh) // sh + 1
    ow = (Wp - kw) // sw + 1
    cpad = _round_up(C, 128)
    xp = jnp.pad(x, ((0, 0), (ph, ph), (pw, pw), (0, cpad - C)),
                 constant_values=pad_val)
    # Only the oh*ow output windows are built -> no compute-then-subsample waste.
    wins = [xp[:, i:i + sh * oh:sh, j:j + sw * ow:sw, :]
            for i in range(kh) for j in range(kw)]
    taps = kh * kw
    m_needed = B * oh * ow
    stack = jnp.stack(wins, axis=0).reshape(taps, m_needed, cpad)
    tm, tc = _pick_tiles(m_needed, cpad)
    grid_m = -(-m_needed // tm)
    m_pad = grid_m * tm
    if m_pad > m_needed:
        stack = jnp.pad(stack, ((0, 0), (0, m_pad - m_needed), (0, 0)),
                        constant_values=pad_val)
    fn = _build_pool(taps, m_pad, cpad, tm, tc, op, 1.0 / taps)
    out = fn(stack)
    return out[:m_needed, :C].reshape(B, oh, ow, C)


# ----------------------------------------------------------------------------
# Kernel 3: softmax
# ----------------------------------------------------------------------------

def _softmax_kernel(x_ref, o_ref):
    x = x_ref[...]
    m = jnp.max(x, axis=-1, keepdims=True)
    e = jnp.exp(x - m)
    o_ref[...] = e / jnp.sum(e, axis=-1, keepdims=True)


def softmax_pallas(x):
    B, L = x.shape
    Bp, Lp = _round_up(B, 8), _round_up(L, 128)
    xp = jnp.full((Bp, Lp), -1e30, jnp.float32).at[:B, :L].set(x)
    out = pl.pallas_call(
        _softmax_kernel,
        out_shape=jax.ShapeDtypeStruct((Bp, Lp), jnp.float32),
        grid=(1,),
        in_specs=[pl.BlockSpec((Bp, Lp), lambda i: (0, 0))],
        out_specs=pl.BlockSpec((Bp, Lp), lambda i: (0, 0)),
    )(xp)
    return out[:B, :L]


# ----------------------------------------------------------------------------
# ConvBlock = Conv2d + BatchNorm2d(eval) + ReLU  (weights packed at build time)
# ----------------------------------------------------------------------------

def _bn_affine(raw):
    scale = raw["gamma"] / jnp.sqrt(raw["var"] + BN_EPS)
    bias = raw["beta"] + (raw["b"] - raw["mean"]) * scale
    return scale, bias


def pack_conv(raw):
    """Pack a ConvBlock as a bf16 (K = kh*kw*cin padded, Npad) matmul weight."""
    w = raw["w"]                                   # (cout, cin, kh, kw) torch layout
    cout, cin, kh, kw = w.shape
    cout_p = _round_up(cout, 128)
    k_real = kh * kw * cin
    k_tap = _round_up(k_real, 128)
    scale, bias = _bn_affine(raw)
    sp = jnp.zeros((1, cout_p), jnp.float32).at[0, :cout].set(scale)
    bp = jnp.zeros((1, cout_p), jnp.float32).at[0, :cout].set(bias)
    wq = jnp.transpose(w, (2, 3, 1, 0)).reshape(k_real, cout)  # (di,dj,c) major order
    wp = jnp.zeros((k_tap, cout_p), jnp.float32).at[:k_real, :cout].set(wq)
    return dict(w=wp.astype(jnp.bfloat16), scale=sp, bias=bp,
                ksize=(kh, kw), stride=raw["stride"], padding=raw["padding"],
                cout=cout, k_real=k_real, k_tap=k_tap)


def pack_fused_1x1(raws):
    """Fuse several parallel 1x1 ConvBlocks (same input) into one matmul along N."""
    cin = raws[0]["w"].shape[1]
    couts = [r["w"].shape[0] for r in raws]
    total = sum(couts)
    cin_p = _round_up(cin, 128)
    cout_p = _round_up(total, 128)
    w = jnp.concatenate([jnp.transpose(r["w"][:, :, 0, 0]) for r in raws], axis=1)
    wp = jnp.zeros((cin_p, cout_p), jnp.float32).at[:cin, :total].set(w)
    sc, bi = zip(*[_bn_affine(r) for r in raws])
    sp = jnp.zeros((1, cout_p), jnp.float32).at[0, :total].set(jnp.concatenate(sc))
    bp = jnp.zeros((1, cout_p), jnp.float32).at[0, :total].set(jnp.concatenate(bi))
    return dict(w=wp.astype(jnp.bfloat16), scale=sp, bias=bp,
                ksize=(1, 1), stride=(1, 1), padding=(0, 0),
                cout=total, k_real=cin, k_tap=cin_p, splits=list(couts))


def conv_apply(x, cp):
    """x: (B, H, W, Cin) bf16 NHWC -> (B, OH, OW, Cout) bf16."""
    kh, kw = cp["ksize"]
    sh, sw = cp["stride"]
    ph, pw = cp["padding"]
    B, H, W, C = x.shape
    Hp, Wp = H + 2 * ph, W + 2 * pw
    oh = (Hp - kh) // sh + 1
    ow = (Wp - kw) // sw + 1
    cout, k_real, k_tap = cp["cout"], cp["k_real"], cp["k_tap"]
    xp = jnp.pad(x, ((0, 0), (ph, ph), (pw, pw), (0, 0)))

    if (sh, sw) == (1, 1):
        # Flat-row K-folding: only (oh-1)*Wp+ow rows are computed; all kh*kw taps
        # are concatenated onto the lane axis -> one tile-aligned matmul.
        flat = xp.reshape(B * Hp * Wp, C)
        m_needed = (B - 1) * Hp * Wp + (oh - 1) * Wp + ow
        if kh * kw == 1:
            cols = flat[:m_needed]
        else:
            cols = jnp.concatenate(
                [flat[di * Wp + dj: di * Wp + dj + m_needed]
                 for di in range(kh) for dj in range(kw)], axis=-1)
        if k_tap > k_real:
            cols = jnp.pad(cols, ((0, 0), (0, k_tap - k_real)))
        out = matmul_fused(cols, cp["w"], cp["scale"], cp["bias"],
                           m_needed=m_needed, relu=True, out_dtype=jnp.bfloat16)
        out = out[:m_needed, :cout]
        full = B * Hp * Wp
        out = jnp.pad(out, ((0, full - m_needed), (0, 0)))
        return out.reshape(B, Hp, Wp, cout)[:, :oh, :ow, :]
    else:
        # Stride-2 convs: strided-window im2col (only oh*ow positions computed).
        cols = [xp[:, i:i + sh * oh:sh, j:j + sw * ow:sw, :]
                for i in range(kh) for j in range(kw)]
        patches = jnp.stack(cols, axis=3).reshape(B * oh * ow, k_real)
        if k_tap > k_real:
            patches = jnp.pad(patches, ((0, 0), (0, k_tap - k_real)))
        m_needed = B * oh * ow
        out = matmul_fused(patches, cp["w"], cp["scale"], cp["bias"],
                           m_needed=m_needed, relu=True, out_dtype=jnp.bfloat16)
        return out[:m_needed, :cout].reshape(B, oh, ow, cout)


def apply_fused_1x1(x, cp):
    out = conv_apply(x, cp)
    res, start = [], 0
    for c in cp["splits"]:
        res.append(out[..., start:start + c])
        start += c
    return res


def apply_seq(ps, x):
    for p in ps:
        x = conv_apply(x, p)
    return x


def pack_fc(w, b):
    """w: (out, in) torch Linear layout -> packed bf16 (K, N) + f32 bias."""
    nout, nin = w.shape
    nin_p = _round_up(nin, 128)
    nout_p = _round_up(nout, 128)
    wp = jnp.zeros((nin_p, nout_p), jnp.float32).at[:nin, :nout].set(w.T)
    sp = jnp.ones((1, nout_p), jnp.float32)
    bp = jnp.zeros((1, nout_p), jnp.float32).at[0, :nout].set(b)
    return dict(w=wp.astype(jnp.bfloat16), scale=sp, bias=bp,
                cout=nout, k_real=nin, k_tap=nin_p)


def fc_apply(x, fp, relu, out_dtype):
    B, nin = x.shape
    xf = x.astype(jnp.bfloat16)
    if fp["k_tap"] > nin:
        xf = jnp.pad(xf, ((0, 0), (0, fp["k_tap"] - nin)))
    out = matmul_fused(xf, fp["w"], fp["scale"], fp["bias"],
                       m_needed=B, relu=relu, out_dtype=out_dtype)
    return out[:B, :fp["cout"]]


# ----------------------------------------------------------------------------
# Parameter construction (deterministic, synthetic)
# ----------------------------------------------------------------------------

class KeyGen:
    def __init__(self, seed):
        self.key = jax.random.PRNGKey(seed)

    def __call__(self):
        self.key, sub = jax.random.split(self.key)
        return sub


def make_raw_cb(kg, cin, cout, ksize, stride, padding):
    if isinstance(ksize, int):
        ksize = (ksize, ksize)
    if isinstance(stride, int):
        stride = (stride, stride)
    if isinstance(padding, int):
        padding = (padding, padding)
    kh, kw = ksize
    fan_in = cin * kh * kw
    return dict(
        w=jax.random.normal(kg(), (cout, cin, kh, kw), jnp.float32)
        * jnp.sqrt(2.0 / fan_in),
        b=0.01 * jax.random.normal(kg(), (cout,), jnp.float32),
        gamma=1.0 + 0.1 * jax.random.normal(kg(), (cout,), jnp.float32),
        beta=0.05 * jax.random.normal(kg(), (cout,), jnp.float32),
        mean=jnp.zeros((cout,), jnp.float32),
        var=jnp.ones((cout,), jnp.float32),
        stride=stride,
        padding=padding,
    )


def make_inception_a(kg, ch):
    b1 = [make_raw_cb(kg, ch, 64, 1, 1, 0), make_raw_cb(kg, 64, 96, 3, 1, 1),
          make_raw_cb(kg, 96, 96, 3, 1, 1)]
    b2 = [make_raw_cb(kg, ch, 64, 1, 1, 0), make_raw_cb(kg, 64, 96, 3, 1, 1)]
    b3 = make_raw_cb(kg, ch, 96, 3, 1, 1)
    b4 = make_raw_cb(kg, ch, 96, 1, 1, 0)
    return dict(fused=pack_fused_1x1([b1[0], b2[0], b4]),
                b1_rest=[pack_conv(b1[1]), pack_conv(b1[2])],
                b2_rest=[pack_conv(b2[1])],
                b3=pack_conv(b3))


def apply_inception_a(p, x):
    f1, f2, o4 = apply_fused_1x1(x, p["fused"])
    o1 = apply_seq(p["b1_rest"], f1)
    o2 = apply_seq(p["b2_rest"], f2)
    o3 = conv_apply(pool2d(x, (3, 3), (1, 1), (1, 1), "max"), p["b3"])
    return jnp.concatenate([o1, o2, o3, o4], axis=-1)


def make_inception_b(kg, ch):
    b1 = [make_raw_cb(kg, ch, 192, 1, 1, 0),
          make_raw_cb(kg, 192, 192, (7, 1), 1, (3, 0)),
          make_raw_cb(kg, 192, 224, (1, 7), 1, (0, 3)),
          make_raw_cb(kg, 224, 224, (7, 1), 1, (3, 0)),
          make_raw_cb(kg, 224, 256, (1, 7), 1, (0, 3))]
    b2 = [make_raw_cb(kg, ch, 192, 1, 1, 0),
          make_raw_cb(kg, 192, 224, (1, 7), 1, (0, 3)),
          make_raw_cb(kg, 224, 256, (7, 1), 1, (3, 0))]
    b3 = make_raw_cb(kg, ch, 128, 1, 1, 0)
    b4 = make_raw_cb(kg, ch, 384, 1, 1, 0)
    return dict(fused=pack_fused_1x1([b1[0], b2[0], b4]),
                b1_rest=[pack_conv(c) for c in b1[1:]],
                b2_rest=[pack_conv(c) for c in b2[1:]],
                b3=pack_conv(b3))


def apply_inception_b(p, x):
    f1, f2, o4 = apply_fused_1x1(x, p["fused"])
    o1 = apply_seq(p["b1_rest"], f1)
    o2 = apply_seq(p["b2_rest"], f2)
    o3 = conv_apply(pool2d(x, (3, 3), (1, 1), (1, 1), "avg"), p["b3"])
    return jnp.concatenate([o1, o2, o3, o4], axis=-1)


def make_inception_c(kg, ch):
    b1 = [make_raw_cb(kg, ch, 384, 1, 1, 0), make_raw_cb(kg, 384, 512, 3, 1, 1)]
    b1_1 = make_raw_cb(kg, 512, 256, (1, 3), 1, (0, 1))
    b1_2 = make_raw_cb(kg, 512, 256, (3, 1), 1, (1, 0))
    b2 = make_raw_cb(kg, ch, 384, 1, 1, 0)
    b2_1 = make_raw_cb(kg, 384, 256, (1, 3), 1, (0, 1))
    b2_2 = make_raw_cb(kg, 384, 256, (3, 1), 1, (1, 0))
    b3 = make_raw_cb(kg, ch, 256, 3, 1, 1)
    b4 = make_raw_cb(kg, ch, 256, 1, 1, 0)
    return dict(fused=pack_fused_1x1([b1[0], b2, b4]),
                b1_tail=pack_conv(b1[1]),
                b1_1=pack_conv(b1_1), b1_2=pack_conv(b1_2),
                b2_1=pack_conv(b2_1), b2_2=pack_conv(b2_2),
                b3=pack_conv(b3))


def apply_inception_c(p, x):
    f1, f2, o4 = apply_fused_1x1(x, p["fused"])
    b1 = conv_apply(f1, p["b1_tail"])
    b1 = jnp.concatenate([conv_apply(b1, p["b1_1"]),
                          conv_apply(b1, p["b1_2"])], axis=-1)
    b2 = jnp.concatenate([conv_apply(f2, p["b2_1"]),
                          conv_apply(f2, p["b2_2"])], axis=-1)
    b3 = conv_apply(pool2d(x, (3, 3), (1, 1), (1, 1), "avg"), p["b3"])
    return jnp.concatenate([b1, b2, b3, o4], axis=-1)


def make_reduction_a(kg, ch):
    b1 = [make_raw_cb(kg, ch, 192, 1, 1, 0), make_raw_cb(kg, 192, 224, 3, 1, 1),
          make_raw_cb(kg, 224, 256, 3, 2, 0)]
    b2 = make_raw_cb(kg, ch, 384, 3, 2, 0)
    return dict(b1=[pack_conv(c) for c in b1], b2=pack_conv(b2))


def apply_reduction_a(p, x):
    o1 = apply_seq(p["b1"], x)
    o2 = conv_apply(x, p["b2"])
    o3 = pool2d(x, (3, 3), (2, 2), (0, 0), "max")
    return jnp.concatenate([o1, o2, o3], axis=-1)


def make_reduction_b(kg, ch):
    b1 = [make_raw_cb(kg, ch, 256, 1, 1, 0),
          make_raw_cb(kg, 256, 256, (1, 7), 1, (0, 3)),
          make_raw_cb(kg, 256, 320, (7, 1), 1, (3, 0)),
          make_raw_cb(kg, 320, 320, 3, 2, 0)]
    b2 = [make_raw_cb(kg, ch, 192, 1, 1, 0), make_raw_cb(kg, 192, 192, 3, 2, 0)]
    return dict(fused=pack_fused_1x1([b1[0], b2[0]]),
                b1_rest=[pack_conv(c) for c in b1[1:]],
                b2_rest=[pack_conv(b2[1])])


def apply_reduction_b(p, x):
    f1, f2 = apply_fused_1x1(x, p["fused"])
    o1 = apply_seq(p["b1_rest"], f1)
    o2 = apply_seq(p["b2_rest"], f2)
    o3 = pool2d(x, (3, 3), (2, 2), (0, 0), "max")
    return jnp.concatenate([o1, o2, o3], axis=-1)


def make_stem(kg, ch):
    conv1 = make_raw_cb(kg, ch, 32, 3, 2, 0)
    conv2 = make_raw_cb(kg, 32, 32, 3, 1, 0)
    conv3 = make_raw_cb(kg, 32, 64, 3, 1, 1)
    conv4 = make_raw_cb(kg, 64, 96, 3, 2, 0)
    b11 = [make_raw_cb(kg, 160, 64, 1, 1, 0),
           make_raw_cb(kg, 64, 64, (1, 7), 1, (0, 3)),
           make_raw_cb(kg, 64, 64, (7, 1), 1, (3, 0)),
           make_raw_cb(kg, 64, 96, 3, 1, 0)]
    b12 = [make_raw_cb(kg, 160, 64, 1, 1, 0), make_raw_cb(kg, 64, 96, 3, 1, 0)]
    b21 = make_raw_cb(kg, 192, 192, 3, 2, 0)
    return dict(conv1=pack_conv(conv1), conv2=pack_conv(conv2),
                conv3=pack_conv(conv3), conv4=pack_conv(conv4),
                fused=pack_fused_1x1([b11[0], b12[0]]),
                b11_rest=[pack_conv(c) for c in b11[1:]],
                b12_rest=[pack_conv(b12[1])],
                b21=pack_conv(b21))


def apply_stem(p, x):
    out = conv_apply(x, p["conv1"])
    out = conv_apply(out, p["conv2"])
    out = conv_apply(out, p["conv3"])
    out = jnp.concatenate(
        [conv_apply(out, p["conv4"]),
         pool2d(out, (3, 3), (2, 2), (0, 0), "max")], axis=-1)
    f1, f2 = apply_fused_1x1(out, p["fused"])
    out = jnp.concatenate(
        [apply_seq(p["b11_rest"], f1), apply_seq(p["b12_rest"], f2)], axis=-1)
    out = jnp.concatenate(
        [conv_apply(out, p["b21"]),
         pool2d(out, (3, 3), (2, 2), (0, 0), "max")], axis=-1)
    return out


def make_googlenet(seed, labels):
    kg = KeyGen(seed)
    return dict(
        stem=make_stem(kg, 3),
        incA=[make_inception_a(kg, 384) for _ in range(4)],
        redA=make_reduction_a(kg, 384),
        incB=[make_inception_b(kg, 1024) for _ in range(7)],
        redB=make_reduction_b(kg, 1024),
        incC=[make_inception_c(kg, 1536) for _ in range(3)],
        fc1=pack_fc(jax.random.normal(kg(), (1536, 1536), jnp.float32)
                    * jnp.sqrt(1.0 / 1536),
                    0.01 * jax.random.normal(kg(), (1536,), jnp.float32)),
        fc2=pack_fc(jax.random.normal(kg(), (labels, 1536), jnp.float32)
                    * jnp.sqrt(1.0 / 1536),
                    0.01 * jax.random.normal(kg(), (labels,), jnp.float32)),
        labels=labels,
    )


def googlenet_forward(params, x_nchw):
    # NCHW f32 -> NHWC bf16 (bf16 feature maps end-to-end).
    x = jnp.transpose(x_nchw, (0, 2, 3, 1)).astype(jnp.bfloat16)
    out = apply_stem(params["stem"], x)
    for bp in params["incA"]:
        out = apply_inception_a(bp, out)
    out = apply_reduction_a(params["redA"], out)
    for bp in params["incB"]:
        out = apply_inception_b(bp, out)
    out = apply_reduction_b(params["redB"], out)
    for bp in params["incC"]:
        out = apply_inception_c(bp, out)
    # AdaptiveAvgPool2d(1) + Flatten (plain-JAX glue)
    out = jnp.mean(out.astype(jnp.float32), axis=(1, 2))            # (B, 1536)
    out = fc_apply(out, params["fc1"], relu=True, out_dtype=jnp.bfloat16)
    out = fc_apply(out, params["fc2"], relu=False, out_dtype=jnp.float32)
    return softmax_pallas(out)


if __name__ == "__main__":
    LABELS = 10
    params = make_googlenet(seed=0, labels=LABELS)

    # Smallest spatial size that survives all stride-2 / valid stages is 75x75.
    key = jax.random.PRNGKey(0)
    x = jax.random.normal(key, (1, 3, 75, 75), jnp.float32)          # NCHW like PyTorch

    y = googlenet_forward(params, x)
    y = jax.block_until_ready(y)

    assert y.shape == (1, LABELS)
    assert bool(jnp.all(jnp.isfinite(y)))
    assert bool(jnp.allclose(jnp.sum(y, axis=1), 1.0, atol=1e-4))
    print("KERNEL_OK")
</pallas_src>

<mosaic_0001>
module attributes {stable_mosaic.version = 11 : i64} {
  func.func @_matmul_bn_relu_kernel(%arg0: i32, %arg1: i32, %arg2: memref<128x128xbf16, #tpu.memory_space<vmem>>, %arg3: memref<128x128xbf16, #tpu.memory_space<vmem>>, %arg4: memref<1x128xf32, #tpu.memory_space<vmem>>, %arg5: memref<1x128xf32, #tpu.memory_space<vmem>>, %arg6: memref<128x128xbf16, #tpu.memory_space<vmem>>) attributes {dimension_semantics = [#tpu.dimension_semantics<parallel>, #tpu.dimension_semantics<parallel>], iteration_bounds = array<i64: 1, 11>, scalar_prefetch = 0 : i64, scratch_operands = 0 : i64, tpu.core_type = #tpu.core_type<tc>, window_params = [{transform_indices = @transform_0, window_bounds = array<i64: 128, 128>}, {transform_indices = @transform_1, window_bounds = array<i64: 128, 128>}, {transform_indices = @transform_2, window_bounds = array<i64: 1, 128>}, {transform_indices = @transform_3, window_bounds = array<i64: 1, 128>}, {transform_indices = @transform_4, window_bounds = array<i64: 128, 128>}]} {
    %c0 = arith.constant 0 : index
    %c0_0 = arith.constant 0 : index
    %0 = vector.load %arg2[%c0, %c0_0] : memref<128x128xbf16, #tpu.memory_space<vmem>>, vector<128x128xbf16>
    %c0_1 = arith.constant 0 : index
    %c0_2 = arith.constant 0 : index
    %1 = vector.load %arg3[%c0_1, %c0_2] : memref<128x128xbf16, #tpu.memory_space<vmem>>, vector<128x128xbf16>
    %cst = arith.constant dense<0.000000e+00> : vector<128x128xf32>
    %2 = tpu.matmul %0, %1, %cst {dimension_numbers = #tpu.dot_dimension_numbers<[1], [0], [0], [1], [0, 0, 1, 1], [], []>} : vector<128x128xbf16>, vector<128x128xbf16>, vector<128x128xf32> -> vector<128x128xf32>
    %c0_3 = arith.constant 0 : index
    %c0_4 = arith.constant 0 : index
    %3 = vector.load %arg4[%c0_3, %c0_4] : memref<1x128xf32, #tpu.memory_space<vmem>>, vector<1x128xf32>
    %4 = vector.broadcast %3 : vector<1x128xf32> to vector<128x128xf32>
    %5 = arith.mulf %2, %4 : vector<128x128xf32>
    %c0_5 = arith.constant 0 : index
    %c0_6 = arith.constant 0 : index
    %6 = vector.load %arg5[%c0_5, %c0_6] : memref<1x128xf32, #tpu.memory_space<vmem>>, vector<1x128xf32>
    %7 = vector.broadcast %6 : vector<1x128xf32> to vector<128x128xf32>
    %8 = arith.addf %5, %7 : vector<128x128xf32>
    %cst_7 = arith.constant 0.000000e+00 : f32
    %9 = vector.broadcast %cst_7 : f32 to vector<128x128xf32>
    %10 = arith.maximumf %8, %9 : vector<128x128xf32>
    %11 = arith.truncf %10 : vector<128x128xf32> to vector<128x128xbf16>
    %c0_8 = arith.constant 0 : index
    %c0_9 = arith.constant 0 : index
    %12 = vector.load %arg6[%c0_8, %c0_9] : memref<128x128xbf16, #tpu.memory_space<vmem>>, vector<128x128xbf16>
    tpu.vector_store %arg6[%c0_8, %c0_9], %11 {strides = array<i32>} : memref<128x128xbf16, #tpu.memory_space<vmem>>, vector<128x128xbf16>,
    return
  }
  func.func @transform_0(%arg0: i32, %arg1: i32) -> (i32, i32) {
    %c0_i32 = arith.constant 0 : i32
    %c0_i32_0 = arith.constant 0 : i32
    return %arg1, %c0_i32 : i32, i32
  }
  func.func @transform_1(%arg0: i32, %arg1: i32) -> (i32, i32) {
    %c0_i32 = arith.constant 0 : i32
    %c0_i32_0 = arith.constant 0 : i32
    return %c0_i32, %arg0 : i32, i32
  }
  func.func @transform_2(%arg0: i32, %arg1: i32) -> (i32, i32) {
    %c0_i32 = arith.constant 0 : i32
    %c0_i32_0 = arith.constant 0 : i32
    return %c0_i32, %arg0 : i32, i32
  }
  func.func @transform_3(%arg0: i32, %arg1: i32) -> (i32, i32) {
    %c0_i32 = arith.constant 0 : i32
    %c0_i32_0 = arith.constant 0 : i32
    return %c0_i32, %arg0 : i32, i32
  }
  func.func @transform_4(%arg0: i32, %arg1: i32) -> (i32, i32) {
    %c0_i32 = arith.constant 0 : i32
    return %arg1, %arg0 : i32, i32
  }
}

</mosaic_0001>

<llo_original>
// kernel: tpu_custom_call.1
$region0: #{tpu_custom_call.1}
  #allocation0 [shape = 'u32[]', space=smem, size = 0x4, offset = 0x4, fixed_abs, tag = 'smem constant byte address 0x4 - core index']
  #allocation1 [shape = 'u32[144,128]{1,0:T(1,128)}', space=vmem, size = 0x12000, scoped, tag = 'internal scratch']
  %s0 = inlined_call_operand.hbm [shape: bf16[1408,128], index: 0, kind: input, shape index: {}]
  %s1 = inlined_call_operand.hbm [shape: bf16[128,128], index: 1, kind: input, shape index: {}]
  %s2 = inlined_call_operand.vmem [shape: f32[1,128], index: 2, kind: input, shape index: {}]
  %s3 = inlined_call_operand.vmem [shape: f32[1,128], index: 3, kind: input, shape index: {}]
  %s4 = inlined_call_operand.hbm [shape: bf16[1408,128], index: 4, kind: output, shape index: {}]
  %s5 = sld [smem:[#allocation0]]
  $region57: #{tpu_custom_call.1} parent=0
    _
  %s7 = ssub.s32 1, %s5
  %s8 = scalar_select 0, %s7, %s5
  $region1: #{tpu_custom_call.1} parent=0
    #allocation2 [shape = 'u8[65536]{0}', space=vmem, size = 0x10000, scoped, tag = 'input window, operand 0']
    #allocation3 [shape = 's32[2]{0}', space=sflag, size = 0x8, scoped, tag = 'scoped memory for tpu_custom_call.1']
    #allocation4 [shape = 's32[2]{0}', space=sflag, size = 0x8, scoped, tag = 'scoped memory for tpu_custom_call.1']
    #allocation5 [shape = 'u8[32768]{0}', space=vmem, size = 0x8000, scoped, tag = 'input window, operand 1, single buffered']
    #allocation6 [shape = 's32[1]{0}', space=sflag, size = 0x4, scoped, tag = 'scoped memory for tpu_custom_call.1']
    #allocation7 [shape = 'u8[65536]{0}', space=vmem, size = 0x10000, scoped, tag = 'output window, operand 0']
    %9 = vsyncpa [#allocation3], 0
    %s10 = scalar_lea.sflag [#allocation3], 1
    %11 = vsyncpa %s10, 0
    %12 = vsyncpa [#allocation6], 0
    %13 = vsyncpa [#allocation4], 0
    %s14 = scalar_lea.sflag [#allocation4], 1
    %15 = vsyncpa %s14, 0
    loop: start=0, step=1, limit=13
    $region2: #{tpu_custom_call.1} parent=1 // loop_pre_header
      _
    $region3: #{tpu_custom_call.1} parent=1 // loop_header
      %s17 = sphi 0, %s21
      %p18 = scmp.ge.s32.totalorder %s17, 13
      %s24 = sphi 0, %s36
      %s25 = sphi 0, %s32
      %s26 = sphi 0, %s24
      %s27 = sphi 0, %s25
      %s28 = sphi 0, %s26
      %s29 = sphi 0, %s27
      %s39 = sphi 0, %s41
      %s42 = sphi 0, %s39
      %s43 = sphi 0, %s42
      %s59 = sphi 0, %s43
      %s65 = sphi 0, %s67
      %s68 = sphi 0, %s65
      %s69 = sphi 0, %s68
      %s85 = sphi 0, %s69
      %s91 = sphi 0, %s93
      %s94 = sphi 0, %s91
      %s95 = sphi 0, %s94
      %s111 = sphi 0, %s95
      %s117 = sphi 0, %s119
      %s120 = sphi 0, %s117
      %s121 = sphi 0, %s120
      %s137 = sphi 0, %s121
      %s145 = sphi 0, %s147
      %s148 = sphi 0, %s145
      %s149 = sphi 0, %s148
      %s165 = sphi 0, %s149
    $region4: #{tpu_custom_call.1} parent=1 // loop_header_branch
      %20 = sbr.rel (%p18) target = $region8
    $region5: #{tpu_custom_call.1} parent=1 // loop_body
      %s22 = ssub.s32 %s17, 1
      %s23 = ssub.s32 %s17, 2
      %s30 = sadd.s32 1, %s25
      %p31 = scmp.ge.s32.totalorder %s30, 11
      %s32 = scalar_select %p31, 0, %s30
      %s33 = sadd.s32 1, %s24
      %s34 = scalar_select %p31, %s33, %s24
      %p35 = scmp.ge.s32.totalorder %s34, 1
      %s36 = scalar_select %p35, 0, %s34
      %s37 = ssub.s32 %s25, %s32
      %p38 = scmp.eq.s32.totalorder %s37, 0
      %s40 = sadd.s32 %s39, 1
      %s41 = scalar_select %p38, %s39, %s40
      %p44 = pneg %p38
      %p45 = scmp.eq.s32.totalorder %s17, 10
      %p46 = por %p44, %p45
      %p47 = scmp.ne.s32.totalorder %s39, %s42
      %p48 = scmp.eq.s32.totalorder %s17, 0
      %p49 = por %p47, %p48
      %p50 = scmp.ne.s32.totalorder %s39, %s42
      %p51 = scmp.eq.s32.totalorder %s22, 10
      %p52 = por %p50, %p51
      %p53 = scmp.ne.s32.totalorder %s42, %s43
      %p54 = scmp.eq.s32.totalorder %s22, 0
      %p55 = por %p53, %p54
      %p56 = scmp.ne.s32.totalorder %s42, %s43
      %p57 = scmp.eq.s32.totalorder %s23, 10
      %p58 = por %p56, %p57
      %p60 = scmp.ne.s32.totalorder %s43, %s59
      %p61 = scmp.eq.s32.totalorder %s23, 0
      %p62 = por %p60, %p61
      %s63 = ssub.s32 %s24, %s36
      %p64 = scmp.eq.s32.totalorder %s63, 0
      %s66 = sadd.s32 %s65, 1
      %s67 = scalar_select %p64, %s65, %s66
      %p70 = pneg %p64
      %p71 = scmp.eq.s32.totalorder %s17, 10
      %p72 = por %p70, %p71
      %p73 = scmp.ne.s32.totalorder %s65, %s68
      %p74 = scmp.eq.s32.totalorder %s17, 0
      %p75 = por %p73, %p74
      %p76 = scmp.ne.s32.totalorder %s65, %s68
      %p77 = scmp.eq.s32.totalorder %s22, 10
      %p78 = por %p76, %p77
      %p79 = scmp.ne.s32.totalorder %s68, %s69
      %p80 = scmp.eq.s32.totalorder %s22, 0
      %p81 = por %p79, %p80
      %p82 = scmp.ne.s32.totalorder %s68, %s69
      %p83 = scmp.eq.s32.totalorder %s23, 10
      %p84 = por %p82, %p83
      %p86 = scmp.ne.s32.totalorder %s69, %s85
      %p87 = scmp.eq.s32.totalorder %s23, 0
      %p88 = por %p86, %p87
      %s89 = ssub.s32 %s24, %s36
      %p90 = scmp.eq.s32.totalorder %s89, 0
      %s92 = sadd.s32 %s91, 1
      %s93 = scalar_select %p90, %s91, %s92
      %p96 = pneg %p90
      %p97 = scmp.eq.s32.totalorder %s17, 10
      %p98 = por %p96, %p97
      %p99 = scmp.ne.s32.totalorder %s91, %s94
      %p100 = scmp.eq.s32.totalorder %s17, 0
      %p101 = por %p99, %p100
      %p102 = scmp.ne.s32.totalorder %s91, %s94
      %p103 = scmp.eq.s32.totalorder %s22, 10
      %p104 = por %p102, %p103
      %p105 = scmp.ne.s32.totalorder %s94, %s95
      %p106 = scmp.eq.s32.totalorder %s22, 0
      %p107 = por %p105, %p106
      %p108 = scmp.ne.s32.totalorder %s94, %s95
      %p109 = scmp.eq.s32.totalorder %s23, 10
      %p110 = por %p108, %p109
      %p112 = scmp.ne.s32.totalorder %s95, %s111
      %p113 = scmp.eq.s32.totalorder %s23, 0
      %p114 = por %p112, %p113
      %s115 = ssub.s32 %s24, %s36
      %p116 = scmp.eq.s32.totalorder %s115, 0
      %s118 = sadd.s32 %s117, 1
      %s119 = scalar_select %p116, %s117, %s118
      %p122 = pneg %p116
      %p123 = scmp.eq.s32.totalorder %s17, 10
      %p124 = por %p122, %p123
      %p125 = scmp.ne.s32.totalorder %s117, %s120
      %p126 = scmp.eq.s32.totalorder %s17, 0
      %p127 = por %p125, %p126
      %p128 = scmp.ne.s32.totalorder %s117, %s120
      %p129 = scmp.eq.s32.totalorder %s22, 10
      %p130 = por %p128, %p129
      %p131 = scmp.ne.s32.totalorder %s120, %s121
      %p132 = scmp.eq.s32.totalorder %s22, 0
      %p133 = por %p131, %p132
      %p134 = scmp.ne.s32.totalorder %s120, %s121
      %p135 = scmp.eq.s32.totalorder %s23, 10
      %p136 = por %p134, %p135
      %p138 = scmp.ne.s32.totalorder %s121, %s137
      %p139 = scmp.eq.s32.totalorder %s23, 0
      %p140 = por %p138, %p139
      %s141 = ssub.s32 %s25, %s32
      %s142 = ssub.s32 %s24, %s36
      %s143 = sor.u32 %s141, %s142
      %p144 = scmp.eq.s32.totalorder %s143, 0
      %s146 = sadd.s32 %s145, 1
      %s147 = scalar_select %p144, %s145, %s146
      %p150 = pneg %p144
      %p151 = scmp.eq.s32.totalorder %s17, 10
      %p152 = por %p150, %p151
      %p153 = scmp.ne.s32.totalorder %s145, %s148
      %p154 = scmp.eq.s32.totalorder %s17, 0
      %p155 = por %p153, %p154
      %p156 = scmp.ne.s32.totalorder %s145, %s148
      %p157 = scmp.eq.s32.totalorder %s22, 10
      %p158 = por %p156, %p157
      %p159 = scmp.ne.s32.totalorder %s148, %s149
      %p160 = scmp.eq.s32.totalorder %s22, 0
      %p161 = por %p159, %p160
      %p162 = scmp.ne.s32.totalorder %s148, %s149
      %p163 = scmp.eq.s32.totalorder %s23, 10
      %p164 = por %p162, %p163
      %p166 = scmp.ne.s32.totalorder %s149, %s165
      %p167 = scmp.eq.s32.totalorder %s23, 0
      %p168 = por %p166, %p167
      %p169 = scmp.le.s32.totalorder 1, %s17
      %p170 = scmp.lt.s32.totalorder %s17, 12
      %p171 = pnand %p169, %p170
      %p172 = pneg %p171
      // Predicated region
      $region9: #{tpu_custom_call.1} parent=5 // pred_check
        _
      $region10: #{tpu_custom_call.1} parent=5 // pred_check_branch
        %174 = sbr.rel (%p171) target = $region12
      $region11: #{tpu_custom_call.1} parent=5 // pred_region
        %s175 = ssub.s32 %s17, 1
        // Predicated region
        $region13: #{tpu_custom_call.1} parent=11 // pred_check
          %p176 = pneg %p81
        $region14: #{tpu_custom_call.1} parent=11 // pred_check_branch
          %178 = sbr.rel (%p176) target = $region16
        $region15: #{tpu_custom_call.1} parent=11 // pred_region
          %s180 = ssub.s32 1024, 1024
          %181 = vsyncadd [#allocation6], %s180
          %s182 = smul.addr %s26, 64
          %s183 = scalar_lea.hbm %s1, %s182
          %s184 = sshll.u32 [#allocation5], 4
          %s185 = int_to_ptr.vmem [resolvable:$true] %s184
          %190 = dma.hbm_to_vmem [thread:$0]  %s183, 1024, %s185, [#allocation6], 64, 64, 4
        $region16: #{tpu_custom_call.1} parent=11 // pred_fallthru
          _
        // Predicated region
        $region17: #{tpu_custom_call.1} parent=11 // pred_check
          %p191 = pneg %p107
        $region18: #{tpu_custom_call.1} parent=11 // pred_check_branch
          %193 = sbr.rel (%p191) target = $region20
        $region19: #{tpu_custom_call.1} parent=11 // pred_region
          %p194 = scmp.lt.s32.totalorder %s26, 0
          %s195 = scalar_select %p194, %s26, 0
          %s196 = scalar_lea.vmem %s2, %s195
        $region20: #{tpu_custom_call.1} parent=11 // pred_fallthru
          _
        // Predicated region
        $region21: #{tpu_custom_call.1} parent=11 // pred_check
          %p197 = pneg %p133
        $region22: #{tpu_custom_call.1} parent=11 // pred_check_branch
          %199 = sbr.rel (%p197) target = $region24
        $region23: #{tpu_custom_call.1} parent=11 // pred_region
          %p200 = scmp.lt.s32.totalorder %s26, 0
          %s201 = scalar_select %p200, %s26, 0
          %s202 = scalar_lea.vmem %s3, %s201
        $region24: #{tpu_custom_call.1} parent=11 // pred_fallthru
          _
      $region12: #{tpu_custom_call.1} parent=5 // pred_fallthru
        _
      %p203 = scmp.lt.s32.totalorder %s17, 11
      // Predicated region
      $region25: #{tpu_custom_call.1} parent=5 // pred_check
        %p204 = pneg %p203
      $region26: #{tpu_custom_call.1} parent=5 // pred_check_branch
        %206 = sbr.rel (%p204) target = $region28
      $region27: #{tpu_custom_call.1} parent=5 // pred_region
        // Predicated region
        $region29: #{tpu_custom_call.1} parent=27 // pred_check
          %p207 = pneg %p49
        $region30: #{tpu_custom_call.1} parent=27 // pred_check_branch
          %209 = sbr.rel (%p207) target = $region32
        $region31: #{tpu_custom_call.1} parent=27 // pred_region
          %s210 = sand.u32 %s39, 1
          %s211 = scalar_lea.sflag [#allocation3], %s210
          %s212 = sand.u32 %s39, 1
          %s213 = smul.addr %s212, 64
          %s214 = scalar_lea.vmem [#allocation2], %s213
          %s215 = smul.u32 16, %s25
          %s217 = ssub.s32 1024, 1024
          %218 = vsyncadd %s211, %s217
          %s219 = smul.addr %s215, 64
          %s220 = scalar_lea.hbm %s0, %s219
          %s221 = sshll.u32 %s214, 4
          %s222 = int_to_ptr.vmem [resolvable:$true] %s221
          %227 = dma.hbm_to_vmem [thread:$0]  %s220, 1024, %s222, %s211, 64, 64, 4
        $region32: #{tpu_custom_call.1} parent=27 // pred_fallthru
          _
      $region28: #{tpu_custom_call.1} parent=5 // pred_fallthru
        _
      %p228 = scmp.le.s32.totalorder 1, %s17
      %p229 = scmp.lt.s32.totalorder %s17, 12
      %p230 = pnand %p228, %p229
      %p231 = pneg %p230
      // Predicated region
      $region33: #{tpu_custom_call.1} parent=5 // pred_check
        _
      $region34: #{tpu_custom_call.1} parent=5 // pred_check_branch
        %233 = sbr.rel (%p230) target = $region36
      $region35: #{tpu_custom_call.1} parent=5 // pred_region
        %s234 = ssub.s32 %s17, 1
        %s235 = sand.u32 %s42, 1
        %s236 = scalar_lea.sflag [#allocation3], %s235
        %s237 = sand.u32 %s42, 1
        %s238 = smul.addr %s237, 64
        %s239 = scalar_lea.vmem [#allocation2], %s238
        // Predicated region
        $region37: #{tpu_custom_call.1} parent=35 // pred_check
          %p240 = pneg %p55
        $region38: #{tpu_custom_call.1} parent=35 // pred_check_branch
          %242 = sbr.rel (%p240) target = $region40
        $region39: #{tpu_custom_call.1} parent=35 // pred_region
          %243 = dma.done %s236, 1024
        $region40: #{tpu_custom_call.1} parent=35 // pred_fallthru
          _
        // Predicated region
        $region41: #{tpu_custom_call.1} parent=35 // pred_check
          %p244 = pneg %p81
        $region42: #{tpu_custom_call.1} parent=35 // pred_check_branch
          %246 = sbr.rel (%p244) target = $region44
        $region43: #{tpu_custom_call.1} parent=35 // pred_region
          %247 = dma.done [#allocation6], 1024
        $region44: #{tpu_custom_call.1} parent=35 // pred_fallthru
          _
        %s248 = sand.u32 %s42, 1
        %s249 = scalar_lea.sflag [#allocation3], %s248
        %s250 = sand.u32 %s42, 1
        %s251 = smul.addr %s250, 64
        %s252 = scalar_lea.vmem [#allocation2], %s251
        %p253 = pneg %p55
        %p254 = pneg %p52
        %p255 = pneg %p81
        %p256 = pneg %p78
        %p257 = scmp.lt.s32.totalorder %s26, 0
        %s258 = scalar_select %p257, %s26, 0
        %s259 = scalar_lea.vmem %s2, %s258
        %p260 = pneg %p107
        %p261 = pneg %p104
        %p262 = scmp.lt.s32.totalorder %s26, 0
        %s263 = scalar_select %p262, %s26, 0
        %s264 = scalar_lea.vmem %s3, %s263
        %p265 = pneg %p133
        %p266 = pneg %p130
        %p267 = pneg %p161
        %p268 = pneg %p158
        %s269 = sand.u32 %s148, 1
        %s270 = scalar_lea.sflag [#allocation4], %s269
        %s271 = sand.u32 %s148, 1
        %s272 = smul.addr %s271, 64
        %s273 = scalar_lea.vmem [#allocation7], %s272
        %s274 = smul.u32 16, %s27
        %p275 = scmp.lt.s32.totalorder %s26, 0
        %s276 = scalar_select %p275, %s26, 0
        %s277 = scalar_lea.vmem %s2, %s276
        %p278 = scmp.lt.s32.totalorder %s26, 0
        %s279 = scalar_select %p278, %s26, 0
        %s280 = scalar_lea.vmem %s3, %s279
        %s281 = smul.u32 16, %s27
        %v283 = vld [vmem:[%s239] sm:$0xf]
        %v284 = vld [vmem:[%s239 + $0x4] sm:$0xf]
        %v285 = vld [vmem:[%s239 + $0x8] sm:$0xf]
        %v286 = vld [vmem:[%s239 + $0xc] sm:$0xf]
        %v287 = vld [vmem:[%s239 + $0x10] sm:$0xf]
        %v288 = vld [vmem:[%s239 + $0x14] sm:$0xf]
        %v289 = vld [vmem:[%s239 + $0x18] sm:$0xf]
        %v290 = vld [vmem:[%s239 + $0x1c] sm:$0xf]
        %v291 = vld [vmem:[%s239 + $0x20] sm:$0xf]
        %v292 = vld [vmem:[%s239 + $0x24] sm:$0xf]
        %v293 = vld [vmem:[%s239 + $0x28] sm:$0xf]
        %v294 = vld [vmem:[%s239 + $0x2c] sm:$0xf]
        %v295 = vld [vmem:[%s239 + $0x30] sm:$0xf]
        %v296 = vld [vmem:[%s239 + $0x34] sm:$0xf]
        %v297 = vld [vmem:[%s239 + $0x38] sm:$0xf]
        %v298 = vld [vmem:[%s239 + $0x3c] sm:$0xf]
        %v299 = vld [vmem:[#allocation5] sm:$0xf]
        %v300 = vld [vmem:[#allocation5 + $0x4] sm:$0xf]
        %v301 = vld [vmem:[#allocation5 + $0x8] sm:$0xf]
        %v302 = vld [vmem:[#allocation5 + $0xc] sm:$0xf]
        %v303 = vld [vmem:[#allocation5 + $0x10] sm:$0xf]
        %v304 = vld [vmem:[#allocation5 + $0x14] sm:$0xf]
        %v305 = vld [vmem:[#allocation5 + $0x18] sm:$0xf]
        %v306 = vld [vmem:[#allocation5 + $0x1c] sm:$0xf]
        %v307 = vld [vmem:[#allocation5 + $0x20] sm:$0xf]
        %v308 = vld [vmem:[#allocation5 + $0x24] sm:$0xf]
        %v309 = vld [vmem:[#allocation5 + $0x28] sm:$0xf]
        %v310 = vld [vmem:[#allocation5 + $0x2c] sm:$0xf]
        %v311 = vld [vmem:[#allocation5 + $0x30] sm:$0xf]
        %v312 = vld [vmem:[#allocation5 + $0x34] sm:$0xf]
        %v313 = vld [vmem:[#allocation5 + $0x38] sm:$0xf]
        %v314 = vld [vmem:[#allocation5 + $0x3c] sm:$0xf]
        %v331 = vunpack.c.l.b16 %v283
        %v332 = vunpack.c.l.b16 %v284
        %v333 = vunpack.c.l.b16 %v285
        %v334 = vunpack.c.l.b16 %v286
        %v335 = vunpack.c.l.b16 %v287
        %v336 = vunpack.c.l.b16 %v288
        %v337 = vunpack.c.l.b16 %v289
        %v338 = vunpack.c.l.b16 %v290
        %v339 = vunpack.c.l.b16 %v291
        %v340 = vunpack.c.l.b16 %v292
        %v341 = vunpack.c.l.b16 %v293
        %v342 = vunpack.c.l.b16 %v294
        %v343 = vunpack.c.l.b16 %v295
        %v344 = vunpack.c.l.b16 %v296
        %v345 = vunpack.c.l.b16 %v297
        %v346 = vunpack.c.l.b16 %v298
        %v347 = vpack.c.b16 %v332, %v331
        %v348 = vpack.c.b16 %v334, %v333
        %v349 = vpack.c.b16 %v336, %v335
        %v350 = vpack.c.b16 %v338, %v337
        %v351 = vpack.c.b16 %v340, %v339
        %v352 = vpack.c.b16 %v342, %v341
        %v353 = vpack.c.b16 %v344, %v343
        %v354 = vpack.c.b16 %v346, %v345
        %v379 = vunpack.c.l.b16 %v299
        %v380 = vunpack.c.l.b16 %v300
        %v381 = vunpack.c.l.b16 %v301
        %v382 = vunpack.c.l.b16 %v302
        %v383 = vunpack.c.l.b16 %v303
        %v384 = vunpack.c.l.b16 %v304
        %v385 = vunpack.c.l.b16 %v305
        %v386 = vunpack.c.l.b16 %v306
        %v387 = vunpack.c.l.b16 %v307
        %v388 = vunpack.c.l.b16 %v308
        %v389 = vunpack.c.l.b16 %v309
        %v390 = vunpack.c.l.b16 %v310
        %v391 = vunpack.c.l.b16 %v311
        %v392 = vunpack.c.l.b16 %v312
        %v393 = vunpack.c.l.b16 %v313
        %v394 = vunpack.c.l.b16 %v314
        %v395 = vpack.c.b16 %v380, %v379
        %v396 = vpack.c.b16 %v382, %v381
        %v397 = vpack.c.b16 %v384, %v383
        %v398 = vpack.c.b16 %v386, %v385
        %v399 = vpack.c.b16 %v388, %v387
        %v400 = vpack.c.b16 %v390, %v389
        %v401 = vpack.c.b16 %v392, %v391
        %v402 = vpack.c.b16 %v394, %v393
        %411 = vmatprep.subr.bf16.mxu0 0
        %412 = vmatpush1.bf16.msra.mxu0 %v395
        %413 = vmatprep.subr.bf16.mxu0 0
        %414 = vmatpush1.bf16.msra.mxu0 %v396
        %415 = vmatprep.subr.bf16.mxu0 0
        %416 = vmatpush1.bf16.msra.mxu0 %v397
        %417 = vmatprep.subr.bf16.mxu0 0
        %418 = vmatpush1.bf16.msra.mxu0 %v398
        %419 = vmatprep.subr.bf16.mxu0 0
        %420 = vmatpush1.bf16.msra.mxu0 %v399
        %421 = vmatprep.subr.bf16.mxu0 0
        %422 = vmatpush1.bf16.msra.mxu0 %v400
        %423 = vmatprep.subr.bf16.mxu0 0
        %424 = vmatpush1.bf16.msra.mxu0 %v401
        %425 = vmatprep.subr.bf16.mxu0 0
        %426 = vmatpush1.bf16.msra.mxu0 %v402
        %427 = vmatprep.subr.bf16.mxu0 0
        %428 = vmatpush1.bf16.msra.mxu0 0
        %429 = vmatprep.subr.bf16.mxu0 0
        %430 = vmatpush1.bf16.msra.mxu0 0
        %431 = vmatprep.subr.bf16.mxu0 0
        %432 = vmatpush1.bf16.msra.mxu0 0
        %433 = vmatprep.subr.bf16.mxu0 0
        %434 = vmatpush1.bf16.msra.mxu0 0
        %435 = vmatprep.subr.bf16.mxu0 0
        %436 = vmatpush1.bf16.msra.mxu0 0
        %437 = vmatprep.subr.bf16.mxu0 0
        %438 = vmatpush1.bf16.msra.mxu0 0
        %439 = vmatprep.subr.bf16.mxu0 0
        %440 = vmatpush1.bf16.msra.mxu0 0
        %441 = vmatprep.subr.bf16.mxu0 0
        %442 = vmatpush1.bf16.msra.mxu0 0
        %443 = vmatprep.mubr.bf16.mxu0 0
        %444 = vmatmul.mubr.bf16.gmra.mrb[0].mxu0 %v347
        %v445 = vpop.f32.mrb[0].mxu0
        %v446 = vadd.f32 0.0, %v445
        %v447 = vpop.f32.mrb[0].mxu0
        %v448 = vpop.f32.mrb[0].mxu0
        %v449 = vadd.f32 0.0, %v448
        %v450 = vpop.f32.mrb[0].mxu0
        %451 = vmatprep.mubr.bf16.mxu0 0
        %452 = vmatmul.mubr.bf16.gmra.mrb[0].mxu0 %v348
        %v453 = vpop.f32.mrb[0].mxu0
        %v454 = vadd.f32 0.0, %v453
        %v455 = vpop.f32.mrb[0].mxu0
        %v456 = vpop.f32.mrb[0].mxu0
        %v457 = vadd.f32 0.0, %v456
        %v458 = vpop.f32.mrb[0].mxu0
        %459 = vmatprep.mubr.bf16.mxu0 0
        %460 = vmatmul.mubr.bf16.gmra.mrb[0].mxu0 %v349
        %v461 = vpop.f32.mrb[0].mxu0
        %v462 = vadd.f32 0.0, %v461
        %v463 = vpop.f32.mrb[0].mxu0
        %v464 = vpop.f32.mrb[0].mxu0
        %v465 = vadd.f32 0.0, %v464
        %v466 = vpop.f32.mrb[0].mxu0
        %467 = vmatprep.mubr.bf16.mxu0 0
        %468 = vmatmul.mubr.bf16.gmra.mrb[0].mxu0 %v350
        %v469 = vpop.f32.mrb[0].mxu0
        %v470 = vadd.f32 0.0, %v469
        %v471 = vpop.f32.mrb[0].mxu0
        %v472 = vpop.f32.mrb[0].mxu0
        %v473 = vadd.f32 0.0, %v472
        %v474 = vpop.f32.mrb[0].mxu0
        %475 = vmatprep.mubr.bf16.mxu0 0
        %476 = vmatmul.mubr.bf16.gmra.mrb[0].mxu0 %v351
        %v477 = vpop.f32.mrb[0].mxu0
        %v478 = vadd.f32 0.0, %v477
        %v479 = vpop.f32.mrb[0].mxu0
        %v480 = vpop.f32.mrb[0].mxu0
        %v481 = vadd.f32 0.0, %v480
        %v482 = vpop.f32.mrb[0].mxu0
        %483 = vmatprep.mubr.bf16.mxu0 0
        %484 = vmatmul.mubr.bf16.gmra.mrb[0].mxu0 %v352
        %v485 = vpop.f32.mrb[0].mxu0
        %v486 = vadd.f32 0.0, %v485
        %v487 = vpop.f32.mrb[0].mxu0
        %v488 = vpop.f32.mrb[0].mxu0
        %v489 = vadd.f32 0.0, %v488
        %v490 = vpop.f32.mrb[0].mxu0
        %491 = vmatprep.mubr.bf16.mxu0 0
        %492 = vmatmul.mubr.bf16.gmra.mrb[0].mxu0 %v353
        %v493 = vpop.f32.mrb[0].mxu0
        %v494 = vadd.f32 0.0, %v493
        %v495 = vpop.f32.mrb[0].mxu0
        %v496 = vpop.f32.mrb[0].mxu0
        %v497 = vadd.f32 0.0, %v496
        %v498 = vpop.f32.mrb[0].mxu0
        %499 = vmatprep.mubr.bf16.mxu0 0
        %500 = vmatmul.mubr.bf16.gmra.mrb[0].mxu0 %v354
        %v501 = vpop.f32.mrb[0].mxu0
        %v502 = vadd.f32 0.0, %v501
        %v503 = vpop.f32.mrb[0].mxu0
        %v504 = vpop.f32.mrb[0].mxu0
        %v505 = vadd.f32 0.0, %v504
        %v506 = vpop.f32.mrb[0].mxu0
        %507 = vdwg.mxu0
        %v508 = vld [vmem:[%s277] sm:$0x1]
        %v510 = vlaneseq
        %v511 = vshrl.u32 %v510, 7
        %v512 = vsub.s32 0, %v511
        %v513 = vrot.slane %v508, %v512
        %v515 = vmul.f32 %v446, %v513
        %v516 = vmul.f32 %v449, %v513
        %v517 = vmul.f32 %v454, %v513
        %v518 = vmul.f32 %v457, %v513
        %v519 = vmul.f32 %v462, %v513
        %v520 = vmul.f32 %v465, %v513
        %v521 = vmul.f32 %v470, %v513
        %v522 = vmul.f32 %v473, %v513
        %v523 = vmul.f32 %v478, %v513
        %v524 = vmul.f32 %v481, %v513
        %v525 = vmul.f32 %v486, %v513
        %v526 = vmul.f32 %v489, %v513
        %v527 = vmul.f32 %v494, %v513
        %v528 = vmul.f32 %v497, %v513
        %v529 = vmul.f32 %v502, %v513
        %v530 = vmul.f32 %v505, %v513
        %v531 = vld [vmem:[%s280] sm:$0x1]
        %v533 = vlaneseq
        %v534 = vshrl.u32 %v533, 7
        %v535 = vsub.s32 0, %v534
        %v536 = vrot.slane %v531, %v535
        %v538 = vadd.f32 %v515, %v536
        %v539 = vadd.f32 %v516, %v536
        %v540 = vadd.f32 %v517, %v536
        %v541 = vadd.f32 %v518, %v536
        %v542 = vadd.f32 %v519, %v536
        %v543 = vadd.f32 %v520, %v536
        %v544 = vadd.f32 %v521, %v536
        %v545 = vadd.f32 %v522, %v536
        %v546 = vadd.f32 %v523, %v536
        %v547 = vadd.f32 %v524, %v536
        %v548 = vadd.f32 %v525, %v536
        %v549 = vadd.f32 %v526, %v536
        %v550 = vadd.f32 %v527, %v536
        %v551 = vadd.f32 %v528, %v536
        %v552 = vadd.f32 %v529, %v536
        %v553 = vadd.f32 %v530, %v536
        %v554 = vmax.f32 %v538, 0.0
        %v555 = vmax.f32 %v539, 0.0
        %v556 = vmax.f32 %v540, 0.0
        %v557 = vmax.f32 %v541, 0.0
        %v558 = vmax.f32 %v542, 0.0
        %v559 = vmax.f32 %v543, 0.0
        %v560 = vmax.f32 %v544, 0.0
        %v561 = vmax.f32 %v545, 0.0
        %v562 = vmax.f32 %v546, 0.0
        %v563 = vmax.f32 %v547, 0.0
        %v564 = vmax.f32 %v548, 0.0
        %v565 = vmax.f32 %v549, 0.0
        %v566 = vmax.f32 %v550, 0.0
        %v567 = vmax.f32 %v551, 0.0
        %v568 = vmax.f32 %v552, 0.0
        %v569 = vmax.f32 %v553, 0.0
        %v570 = vpack.c.bf16 %v555, %v554
        %v571 = vpack.c.bf16 %v557, %v556
        %v572 = vpack.c.bf16 %v559, %v558
        %v573 = vpack.c.bf16 %v561, %v560
        %v574 = vpack.c.bf16 %v563, %v562
        %v575 = vpack.c.bf16 %v565, %v564
        %v576 = vpack.c.bf16 %v567, %v566
        %v577 = vpack.c.bf16 %v569, %v568
        %v586 = vunpack.c.l.b16 %v570
        %v587 = vunpack.c.h.b16 %v570
        %v588 = vunpack.c.l.b16 %v571
        %v589 = vunpack.c.h.b16 %v571
        %v590 = vunpack.c.l.b16 %v572
        %v591 = vunpack.c.h.b16 %v572
        %v592 = vunpack.c.l.b16 %v573
        %v593 = vunpack.c.h.b16 %v573
        %v594 = vunpack.c.l.b16 %v574
        %v595 = vunpack.c.h.b16 %v574
        %v596 = vunpack.c.l.b16 %v575
        %v597 = vunpack.c.h.b16 %v575
        %v598 = vunpack.c.l.b16 %v576
        %v599 = vunpack.c.h.b16 %v576
        %v600 = vunpack.c.l.b16 %v577
        %v601 = vunpack.c.h.b16 %v577
        %v602 = vpack.c.b16 %v586, %v586
        %v603 = vpack.c.b16 %v587, %v587
        %v604 = vpack.c.b16 %v588, %v588
        %v605 = vpack.c.b16 %v589, %v589
        %v606 = vpack.c.b16 %v590, %v590
        %v607 = vpack.c.b16 %v591, %v591
        %v608 = vpack.c.b16 %v592, %v592
        %v609 = vpack.c.b16 %v593, %v593
        %v610 = vpack.c.b16 %v594, %v594
        %v611 = vpack.c.b16 %v595, %v595
        %v612 = vpack.c.b16 %v596, %v596
        %v613 = vpack.c.b16 %v597, %v597
        %v614 = vpack.c.b16 %v598, %v598
        %v615 = vpack.c.b16 %v599, %v599
        %v616 = vpack.c.b16 %v600, %v600
        %v617 = vpack.c.b16 %v601, %v601
        %634 = vst [vmem:[%s273] sm:$0xf] %v602
        %635 = vst [vmem:[%s273 + $0x4] sm:$0xf] %v603
        %636 = vst [vmem:[%s273 + $0x8] sm:$0xf] %v604
        %637 = vst [vmem:[%s273 + $0xc] sm:$0xf] %v605
        %638 = vst [vmem:[%s273 + $0x10] sm:$0xf] %v606
        %639 = vst [vmem:[%s273 + $0x14] sm:$0xf] %v607
        %640 = vst [vmem:[%s273 + $0x18] sm:$0xf] %v608
        %641 = vst [vmem:[%s273 + $0x1c] sm:$0xf] %v609
        %642 = vst [vmem:[%s273 + $0x20] sm:$0xf] %v610
        %643 = vst [vmem:[%s273 + $0x24] sm:$0xf] %v611
        %644 = vst [vmem:[%s273 + $0x28] sm:$0xf] %v612
        %645 = vst [vmem:[%s273 + $0x2c] sm:$0xf] %v613
        %646 = vst [vmem:[%s273 + $0x30] sm:$0xf] %v614
        %647 = vst [vmem:[%s273 + $0x34] sm:$0xf] %v615
        %648 = vst [vmem:[%s273 + $0x38] sm:$0xf] %v616
        %649 = vst [vmem:[%s273 + $0x3c] sm:$0xf] %v617
        %s650 = sand.u32 %s148, 1
        %s651 = scalar_lea.sflag [#allocation4], %s650
        %s652 = sand.u32 %s148, 1
        %s653 = smul.addr %s652, 64
        %s654 = scalar_lea.vmem [#allocation7], %s653
        // Predicated region
        $region45: #{tpu_custom_call.1} parent=35 // pred_check
          %p655 = pneg %p158
        $region46: #{tpu_custom_call.1} parent=35 // pred_check_branch
          %657 = sbr.rel (%p655) target = $region48
        $region47: #{tpu_custom_call.1} parent=35 // pred_region
          %s658 = smul.u32 16, %s27
          %s660 = ssub.s32 1024, 1024
          %661 = vsyncadd %s651, %s660
          %s662 = sadd.s32 %s26, %s658
          %s663 = smul.addr %s662, 64
          %s664 = scalar_lea.hbm %s4, %s663
          %s665 = sshll.u32 %s654, 4
          %s666 = int_to_ptr.vmem [resolvable:$true] %s665
          %671 = dma.vmem_to_hbm [thread:$0]  %s666, 1024, %s664, %s651, 64, 64, 4
        $region48: #{tpu_custom_call.1} parent=35 // pred_fallthru
          _
      $region36: #{tpu_custom_call.1} parent=5 // pred_fallthru
        _
      %p672 = scmp.le.s32.totalorder 2, %s17
      // Predicated region
      $region49: #{tpu_custom_call.1} parent=5 // pred_check
        %p673 = pneg %p672
      $region50: #{tpu_custom_call.1} parent=5 // pred_check_branch
        %675 = sbr.rel (%p673) target = $region52
      $region51: #{tpu_custom_call.1} parent=5 // pred_region
        %s676 = ssub.s32 %s17, 2
        // Predicated region
        $region53: #{tpu_custom_call.1} parent=51 // pred_check
          %p677 = pneg %p164
        $region54: #{tpu_custom_call.1} parent=51 // pred_check_branch
          %679 = sbr.rel (%p677) target = $region56
        $region55: #{tpu_custom_call.1} parent=51 // pred_region
          %s680 = sand.u32 %s149, 1
          %s681 = scalar_lea.sflag [#allocation4], %s680
          %s682 = sand.u32 %s149, 1
          %s683 = smul.addr %s682, 64
          %s684 = scalar_lea.vmem [#allocation7], %s683
          %685 = dma.done %s681, 1024
        $region56: #{tpu_custom_call.1} parent=51 // pred_fallthru
          _
      $region52: #{tpu_custom_call.1} parent=5 // pred_fallthru
        _
    $region6: #{tpu_custom_call.1} parent=1 // loop_footer
      %s21 = sadd.s32 1, %s17
    $region7: #{tpu_custom_call.1} parent=1 // loop_footer_branch
      %16 = sbr.rel target = $region3
    $region8: #{tpu_custom_call.1} parent=1 // loop_exit
      _
    %686 = vsyncpa [#allocation3], 1
    %s687 = scalar_lea.sflag [#allocation3], 1
    %688 = vsyncpa %s687, 1
    %689 = vsyncpa [#allocation6], 1
    %690 = vsyncpa [#allocation4], 1
    %s691 = scalar_lea.sflag [#allocation4], 1
    %692 = vsyncpa %s691, 1

</llo_original>
